<compile_context>
chip_gen: v7x
topology: tpu7x:2x2x1
jax: 0.10.0
libtpu: 0.0.40
codegen_flags: <defaults>
</compile_context>

<pallas_src>
from functools import partial

import jax
import jax.numpy as jnp
from jax.experimental import pallas as pl
from jax.experimental.pallas import tpu as pltpu

D_IN, D_H, D_OUT = 3, 32, 1


def _mlp_kernel(x_ref, w1a_ref, w2_ref, b2_ref, w3t_ref, b3_ref, o_ref):
    # Feature-major layout (batch on lanes):
    #   x_ref : (4, TB)   bf16   rows = [x0, x1, x2, 1.0]
    #   w1a   : (32, 4)   bf16   [fc1.weight | fc1.bias]  (bias folded)
    #   w2    : (32, 32)  bf16   fc2.weight (out, in)
    #   b2    : (32, 1)   f32
    #   w3t   : (1, 32)   bf16   fc3.weight (out, in)
    #   b3    : (1, 1)    f32
    #   o_ref : (1, TB)   f32    lane-dense output tile
    x = x_ref[...]                                                   # (4, TB) bf16

    # layer 1: low-utilization K=4 MXU pass (bias folded), f32 accumulation.
    h1 = jnp.dot(w1a_ref[...], x, preferred_element_type=jnp.float32)   # (32, TB)
    h1 = jnp.maximum(h1, 0.0)

    # layer 2: dense 32x32 MXU pass, bf16 operands, f32 accumulation.
    h2 = jnp.dot(w2_ref[...], h1.astype(jnp.bfloat16),
                 preferred_element_type=jnp.float32)                    # (32, TB)
    h2 = jnp.maximum(h2 + b2_ref[...], 0.0)

    # layer 3: M=1 MXU pass (rides the idle MXU slot instead of the VALU).
    out = jnp.dot(w3t_ref[...], h2.astype(jnp.bfloat16),
                  preferred_element_type=jnp.float32)                   # (1, TB)
    o_ref[...] = (out + b3_ref[...]).astype(o_ref.dtype)


@partial(jax.jit, static_argnums=(2, 3))
def _forward_impl(x, params, tb, n_pad):
    N = x.shape[0]
    w1, b1 = params["w1"], params["b1"]
    w2, b2 = params["w2"], params["b2"]
    w3, b3 = params["w3"], params["b3"]

    x = x.astype(jnp.float32)

    # Single fused preprocessing pass (under this jit): append a ones-row for
    # the folded fc1 bias, pad the batch to the lane tile, transpose to
    # feature-major, cast to bf16.  One read + one write of x, not two.
    x_aug = jnp.concatenate([x, jnp.ones((N, 1), jnp.float32)], axis=1)        # (N, 4)
    x_fm = jnp.pad(x_aug, ((0, n_pad - N), (0, 0))).T.astype(jnp.bfloat16)     # (4, n_pad)

    # Tiny, one-off weight plumbing (kept out of the kernel's VPU slots).
    w1a = jnp.concatenate([w1, b1[:, None]], axis=1).astype(jnp.bfloat16)      # (32, 4)
    w2b = w2.astype(jnp.bfloat16)                                              # (32, 32)
    b2c = b2[:, None].astype(jnp.float32)                                      # (32, 1)
    w3t = w3.astype(jnp.bfloat16)                                              # (1, 32)
    b3c = b3[None, :].astype(jnp.float32)                                      # (1, 1)

    grid = (n_pad // tb,)
    const = lambda shape: pl.BlockSpec(shape, lambda i: (0, 0))   # resident params

    out_fm = pl.pallas_call(
        _mlp_kernel,
        out_shape=jax.ShapeDtypeStruct((D_OUT, n_pad), jnp.float32),
        grid_spec=pltpu.PrefetchScalarGridSpec(
            num_scalar_prefetch=0,
            grid=grid,
            in_specs=[
                pl.BlockSpec((D_IN + 1, tb), lambda i: (0, i)),   # x slab, lane-dense
                const((D_H, D_IN + 1)),                           # [w1 | b1]
                const((D_H, D_H)),                                # w2
                const((D_H, 1)),                                  # b2
                const((D_OUT, D_H)),                              # w3
                const((D_OUT, 1)),                                # b3
            ],
            out_specs=pl.BlockSpec((D_OUT, tb), lambda i: (0, i)),  # lane-dense store
        ),
        compiler_params=pltpu.CompilerParams(
            # Independent batch tiles -> shardable across v7x's two TensorCores.
            # (Switch to pltpu.CORE_PARALLEL if a v7x profile shows one TC idle.)
            dimension_semantics=("parallel",),
        ),
    )(x_fm, w1a, w2b, b2c, w3t, b3c)                  # (1, n_pad) f32

    return out_fm[:, :N].T                            # (N, 1)


def neural_net_forward(x, params, *, tb_lanes=32768):
    """Forward pass.  x: (N, 3) float32 -> (N, 1) float32.

    tb_lanes: max batch rows (lanes) per grid step, rounded down to a multiple
    of 128.  32768 amortizes the ~0.35 us/step grid overhead to <15% while
    keeping per-step VMEM (~13 MB of intermediates + <1 MB double-buffered I/O)
    under the 32 MiB scoped default on all of v5e / v6e / v7x.
    """
    N = x.shape[0]
    if N == 0:
        return jnp.zeros((0, D_OUT), jnp.float32)
    tb_cap = max(128, (int(tb_lanes) // 128) * 128)
    tb = min(tb_cap, -(-N // 128) * 128)      # multiple of 128, >= 128
    n_pad = -(-N // tb) * tb
    return _forward_impl(x, params, tb, n_pad)


def init_params(key):
    """Deterministic synthetic parameters, PyTorch nn.Linear layout & init.

    w1 (32, 3), w2 (32, 32), w3 (1, 32): (out, in) like PyTorch.
    b1 (32,), b2 (32,), b3 (1,).
    All kernel-side layout plumbing (bias folding, transposes, bf16 casts)
    happens in the wrapper, so the params mirror the nn.Module exactly.
    """
    k1, k2, k3, k4, k5, k6 = jax.random.split(key, 6)

    def uniform(k, shape, fan_in):
        bound = 1.0 / float(fan_in) ** 0.5
        return jax.random.uniform(k, shape, jnp.float32, -bound, bound)

    return {
        "w1": uniform(k1, (D_H, D_IN), D_IN),
        "b1": uniform(k2, (D_H,), D_IN),
        "w2": uniform(k3, (D_H, D_H), D_H),
        "b2": uniform(k4, (D_H,), D_H),
        "w3": uniform(k5, (D_OUT, D_H), D_H),
        "b3": uniform(k6, (D_OUT,), D_H),
    }


def reference_forward(x, p):
    """Plain-XLA f32 reference matching the PyTorch module."""
    h1 = jnp.maximum(x @ p["w1"].T + p["b1"], 0.0)
    h2 = jnp.maximum(h1 @ p["w2"].T + p["b2"], 0.0)
    return h2 @ p["w3"].T + p["b3"]


if __name__ == "__main__":
    key = jax.random.PRNGKey(0)
    kx, kp = jax.random.split(key)
    params = init_params(kp)

    # Tolerance budgets for bf16 MXU operands (f32 accumulation) vs f32 reference.
    ATOL = RTOL = 1e-2

    # Small demo batch (wrapper pads it to one 128-lane tile).
    N = 16
    x = jax.random.normal(kx, (N, D_IN), dtype=jnp.float32)
    out = jax.block_until_ready(neural_net_forward(x, params))
    ref = reference_forward(x, params)
    assert out.shape == (N, D_OUT)
    assert jnp.allclose(out, ref, atol=ATOL, rtol=RTOL)

    # Multi-step grid + ragged batch (pad/slice path, 3 grid steps of 128 lanes).
    N2 = 300
    x2 = jax.random.normal(jax.random.PRNGKey(1), (N2, D_IN), dtype=jnp.float32)
    out2 = jax.block_until_ready(neural_net_forward(x2, params, tb_lanes=128))
    ref2 = reference_forward(x2, params)
    assert out2.shape == (N2, D_OUT)
    assert jnp.allclose(out2, ref2, atol=ATOL, rtol=RTOL)

    # Larger single tile under the default cap (exercises the wide-lane path).
    N3 = 4096
    x3 = jax.random.normal(jax.random.PRNGKey(2), (N3, D_IN), dtype=jnp.float32)
    out3 = jax.block_until_ready(neural_net_forward(x3, params))
    ref3 = reference_forward(x3, params)
    assert out3.shape == (N3, D_OUT)
    assert jnp.allclose(out3, ref3, atol=ATOL, rtol=RTOL)

    print("KERNEL_OK")
</pallas_src>

<mosaic_0001>
module attributes {stable_mosaic.version = 11 : i64} {
  func.func @_mlp_kernel(%arg0: i32, %arg1: memref<4x128xbf16, #tpu.memory_space<vmem>>, %arg2: memref<32x4xbf16, #tpu.memory_space<vmem>>, %arg3: memref<32x32xbf16, #tpu.memory_space<vmem>>, %arg4: memref<32x1xf32, #tpu.memory_space<vmem>>, %arg5: memref<1x32xbf16, #tpu.memory_space<vmem>>, %arg6: memref<1x1xf32, #tpu.memory_space<vmem>>, %arg7: memref<1x128xf32, #tpu.memory_space<vmem>>) attributes {dimension_semantics = [#tpu.dimension_semantics<parallel>], iteration_bounds = array<i64: 1>, scalar_prefetch = 0 : i64, scratch_operands = 0 : i64, tpu.core_type = #tpu.core_type<tc>, window_params = [{transform_indices = @transform_0, window_bounds = array<i64: 4, 128>}, {pipeline_mode = #tpu.pipeline_mode<synchronous>, transform_indices = @transform_1, window_bounds = array<i64: 32, 4>}, {pipeline_mode = #tpu.pipeline_mode<synchronous>, transform_indices = @transform_2, window_bounds = array<i64: 32, 32>}, {pipeline_mode = #tpu.pipeline_mode<synchronous>, transform_indices = @transform_3, window_bounds = array<i64: 32, 1>}, {pipeline_mode = #tpu.pipeline_mode<synchronous>, transform_indices = @transform_4, window_bounds = array<i64: 1, 32>}, {pipeline_mode = #tpu.pipeline_mode<synchronous>, transform_indices = @transform_5, window_bounds = array<i64: 1, 1>}, {transform_indices = @transform_6, window_bounds = array<i64: 1, 128>}]} {
    %c0 = arith.constant 0 : index
    %c0_0 = arith.constant 0 : index
    %0 = vector.load %arg1[%c0, %c0_0] : memref<4x128xbf16, #tpu.memory_space<vmem>>, vector<4x128xbf16>
    %c0_1 = arith.constant 0 : index
    %c0_2 = arith.constant 0 : index
    %1 = vector.load %arg2[%c0_1, %c0_2] : memref<32x4xbf16, #tpu.memory_space<vmem>>, vector<32x4xbf16>
    %cst = arith.constant dense<0.000000e+00> : vector<32x128xf32>
    %2 = tpu.matmul %1, %0, %cst {dimension_numbers = #tpu.dot_dimension_numbers<[1], [0], [0], [1], [0, 0, 1, 1], [], []>} : vector<32x4xbf16>, vector<4x128xbf16>, vector<32x128xf32> -> vector<32x128xf32>
    %cst_3 = arith.constant 0.000000e+00 : f32
    %3 = vector.broadcast %cst_3 : f32 to vector<32x128xf32>
    %4 = arith.maximumf %2, %3 : vector<32x128xf32>
    %c0_4 = arith.constant 0 : index
    %c0_5 = arith.constant 0 : index
    %5 = vector.load %arg3[%c0_4, %c0_5] : memref<32x32xbf16, #tpu.memory_space<vmem>>, vector<32x32xbf16>
    %6 = arith.truncf %4 : vector<32x128xf32> to vector<32x128xbf16>
    %cst_6 = arith.constant dense<0.000000e+00> : vector<32x128xf32>
    %7 = tpu.matmul %5, %6, %cst_6 {dimension_numbers = #tpu.dot_dimension_numbers<[1], [0], [0], [1], [0, 0, 1, 1], [], []>} : vector<32x32xbf16>, vector<32x128xbf16>, vector<32x128xf32> -> vector<32x128xf32>
    %c0_7 = arith.constant 0 : index
    %c0_8 = arith.constant 0 : index
    %8 = vector.load %arg4[%c0_7, %c0_8] : memref<32x1xf32, #tpu.memory_space<vmem>>, vector<32x1xf32>
    %9 = vector.broadcast %8 : vector<32x1xf32> to vector<32x128xf32>
    %10 = arith.addf %7, %9 : vector<32x128xf32>
    %cst_9 = arith.constant 0.000000e+00 : f32
    %11 = vector.broadcast %cst_9 : f32 to vector<32x128xf32>
    %12 = arith.maximumf %10, %11 : vector<32x128xf32>
    %c0_10 = arith.constant 0 : index
    %c0_11 = arith.constant 0 : index
    %13 = vector.load %arg5[%c0_10, %c0_11] : memref<1x32xbf16, #tpu.memory_space<vmem>>, vector<1x32xbf16>
    %14 = arith.truncf %12 : vector<32x128xf32> to vector<32x128xbf16>
    %cst_12 = arith.constant dense<0.000000e+00> : vector<1x128xf32>
    %15 = tpu.matmul %13, %14, %cst_12 {dimension_numbers = #tpu.dot_dimension_numbers<[1], [0], [0], [1], [0, 0, 1, 1], [], []>} : vector<1x32xbf16>, vector<32x128xbf16>, vector<1x128xf32> -> vector<1x128xf32>
    %c0_13 = arith.constant 0 : index
    %c0_14 = arith.constant 0 : index
    %16 = vector.load %arg6[%c0_13, %c0_14] : memref<1x1xf32, #tpu.memory_space<vmem>>, vector<1x1xf32>
    %17 = vector.broadcast %16 : vector<1x1xf32> to vector<1x128xf32>
    %18 = arith.addf %15, %17 : vector<1x128xf32>
    %c0_15 = arith.constant 0 : index
    %c0_16 = arith.constant 0 : index
    %19 = vector.load %arg7[%c0_15, %c0_16] : memref<1x128xf32, #tpu.memory_space<vmem>>, vector<1x128xf32>
    tpu.vector_store %arg7[%c0_15, %c0_16], %18 {strides = array<i32>} : memref<1x128xf32, #tpu.memory_space<vmem>>, vector<1x128xf32>,
    return
  }
  func.func @transform_0(%arg0: i32) -> (i32, i32) {
    %c0_i32 = arith.constant 0 : i32
    %c0_i32_0 = arith.constant 0 : i32
    return %c0_i32, %arg0 : i32, i32
  }
  func.func @transform_1(%arg0: i32) -> (i32, i32) {
    %c0_i32 = arith.constant 0 : i32
    %c0_i32_0 = arith.constant 0 : i32
    %c0_i32_1 = arith.constant 0 : i32
    return %c0_i32, %c0_i32_0 : i32, i32
  }
  func.func @transform_2(%arg0: i32) -> (i32, i32) {
    %c0_i32 = arith.constant 0 : i32
    %c0_i32_0 = arith.constant 0 : i32
    %c0_i32_1 = arith.constant 0 : i32
    return %c0_i32, %c0_i32_0 : i32, i32
  }
  func.func @transform_3(%arg0: i32) -> (i32, i32) {
    %c0_i32 = arith.constant 0 : i32
    %c0_i32_0 = arith.constant 0 : i32
    %c0_i32_1 = arith.constant 0 : i32
    return %c0_i32, %c0_i32_0 : i32, i32
  }
  func.func @transform_4(%arg0: i32) -> (i32, i32) {
    %c0_i32 = arith.constant 0 : i32
    %c0_i32_0 = arith.constant 0 : i32
    %c0_i32_1 = arith.constant 0 : i32
    return %c0_i32, %c0_i32_0 : i32, i32
  }
  func.func @transform_5(%arg0: i32) -> (i32, i32) {
    %c0_i32 = arith.constant 0 : i32
    %c0_i32_0 = arith.constant 0 : i32
    %c0_i32_1 = arith.constant 0 : i32
    return %c0_i32, %c0_i32_0 : i32, i32
  }
  func.func @transform_6(%arg0: i32) -> (i32, i32) {
    %c0_i32 = arith.constant 0 : i32
    %c0_i32_0 = arith.constant 0 : i32
    return %c0_i32, %arg0 : i32, i32
  }
}

</mosaic_0001>

<llo_original>
// kernel: _forward_impl.1
$region0: #{_forward_impl.1}
  #allocation0 [shape = 'u32[]', space=smem, size = 0x4, offset = 0x4, fixed_abs, tag = 'smem constant byte address 0x4 - core index']
  #allocation1 [shape = 'u32[144,128]{1,0:T(1,128)}', space=vmem, size = 0x12000, scoped, tag = 'internal scratch']
  #allocation2 [shape = 'f32[1,1]{1,0:T(1,128)S(1)}', space=vmem, size = 0x200, scoped, tag = 'scoped memory for _forward_impl.1']
  %s0 = inlined_call_operand.vmem [shape: bf16[4,128], index: 0, kind: input, shape index: {}]
  %s1 = inlined_call_operand.vmem [shape: bf16[32,4], index: 1, kind: input, shape index: {}]
  %s2 = inlined_call_operand.vmem [shape: bf16[32,32], index: 2, kind: input, shape index: {}]
  %s3 = inlined_call_operand.vmem [shape: f32[32,1], index: 3, kind: input, shape index: {}]
  %s4 = inlined_call_operand.vmem [shape: bf16[1,32], index: 4, kind: input, shape index: {}]
  %s5 = inlined_call_operand.<no memory space> [shape: f32[1,1], index: 5, kind: input, shape index: {}]
  %s6 = inlined_call_operand.vmem [shape: f32[1,128], index: 6, kind: output, shape index: {}]
  %s7 = sld [smem:[#allocation0]]
  $region34: #{_forward_impl.1} parent=0
    _
  %s9 = ssub.s32 1, %s7
  %s10 = scalar_select 0, %s9, %s7
  %v11 = vstv %s5
  %12 = vst [vmem:[#allocation2] sm:$0x1] %v11
  // Predicated region
  $region2: #{_forward_impl.1} parent=0 // pred_check
    _
  $region3: #{_forward_impl.1} parent=0 // pred_check_branch
    %14 = sbr.rel (0) target = $region5
  $region4: #{_forward_impl.1} parent=0 // pred_region
    _
  $region5: #{_forward_impl.1} parent=0 // pred_fallthru
    _
  // Predicated region
  $region6: #{_forward_impl.1} parent=0 // pred_check
    _
  $region7: #{_forward_impl.1} parent=0 // pred_check_branch
    %16 = sbr.rel (0) target = $region9
  $region8: #{_forward_impl.1} parent=0 // pred_region
    _
  $region9: #{_forward_impl.1} parent=0 // pred_fallthru
    _
  // Predicated region
  $region10: #{_forward_impl.1} parent=0 // pred_check
    _
  $region11: #{_forward_impl.1} parent=0 // pred_check_branch
    %18 = sbr.rel (0) target = $region13
  $region12: #{_forward_impl.1} parent=0 // pred_region
    _
  $region13: #{_forward_impl.1} parent=0 // pred_fallthru
    _
  // Predicated region
  $region14: #{_forward_impl.1} parent=0 // pred_check
    _
  $region15: #{_forward_impl.1} parent=0 // pred_check_branch
    %20 = sbr.rel (0) target = $region17
  $region16: #{_forward_impl.1} parent=0 // pred_region
    _
  $region17: #{_forward_impl.1} parent=0 // pred_fallthru
    _
  // Predicated region
  $region18: #{_forward_impl.1} parent=0 // pred_check
    _
  $region19: #{_forward_impl.1} parent=0 // pred_check_branch
    %22 = sbr.rel (0) target = $region21
  $region20: #{_forward_impl.1} parent=0 // pred_region
    _
  $region21: #{_forward_impl.1} parent=0 // pred_fallthru
    _
  // Predicated region
  $region22: #{_forward_impl.1} parent=0 // pred_check
    _
  $region23: #{_forward_impl.1} parent=0 // pred_check_branch
    %24 = sbr.rel (0) target = $region25
  $region24: #{_forward_impl.1} parent=0 // pred_region
    _
  $region25: #{_forward_impl.1} parent=0 // pred_fallthru
    _
  %v26 = vld [vmem:[%s0] sm:$0x3]
  %v27 = vld [vmem:[%s1] sm:$0xf]
  %v28 = vld [vmem:[%s1 + $0x4] sm:$0xf]
  %v29 = vld [vmem:[%s1 + $0x8] sm:$0xf]
  %v30 = vld [vmem:[%s1 + $0xc] sm:$0xf]
  %v35 = vunpack.c.l.b16 %v27
  %v36 = vunpack.c.l.b16 %v28
  %v37 = vunpack.c.l.b16 %v29
  %v38 = vunpack.c.l.b16 %v30
  %v39 = vpack.c.b16 %v36, %v35
  %v40 = vpack.c.b16 %v38, %v37
  %vm41 = vcmask 31744
  %v43 = vsel %vm41, %v39, 0
  %v46 = vsel %vm41, %v40, 0
  %vm48 = vcmask 1041408
  %v50 = vsel %vm48, %v26, 0
  %52 = vmatprep.subr.bf16.mxu0 0
  %53 = vmatpush1.bf16.msra.mxu0 %v50
  %54 = vmatprep.subr.bf16.mxu0 0
  %55 = vmatpush1.bf16.msra.mxu0 0
  %56 = vmatprep.subr.bf16.mxu0 0
  %57 = vmatpush1.bf16.msra.mxu0 0
  %58 = vmatprep.subr.bf16.mxu0 0
  %59 = vmatpush1.bf16.msra.mxu0 0
  %60 = vmatprep.subr.bf16.mxu0 0
  %61 = vmatpush1.bf16.msra.mxu0 0
  %62 = vmatprep.subr.bf16.mxu0 0
  %63 = vmatpush1.bf16.msra.mxu0 0
  %64 = vmatprep.subr.bf16.mxu0 0
  %65 = vmatpush1.bf16.msra.mxu0 0
  %66 = vmatprep.subr.bf16.mxu0 0
  %67 = vmatpush1.bf16.msra.mxu0 0
  %68 = vmatprep.subr.bf16.mxu0 0
  %69 = vmatpush1.bf16.msra.mxu0 0
  %70 = vmatprep.subr.bf16.mxu0 0
  %71 = vmatpush1.bf16.msra.mxu0 0
  %72 = vmatprep.subr.bf16.mxu0 0
  %73 = vmatpush1.bf16.msra.mxu0 0
  %74 = vmatprep.subr.bf16.mxu0 0
  %75 = vmatpush1.bf16.msra.mxu0 0
  %76 = vmatprep.subr.bf16.mxu0 0
  %77 = vmatpush1.bf16.msra.mxu0 0
  %78 = vmatprep.subr.bf16.mxu0 0
  %79 = vmatpush1.bf16.msra.mxu0 0
  %80 = vmatprep.subr.bf16.mxu0 0
  %81 = vmatpush1.bf16.msra.mxu0 0
  %82 = vmatprep.subr.bf16.mxu0 0
  %83 = vmatpush1.bf16.msra.mxu0 0
  %84 = vmatprep.mubr.bf16.mxu0 0
  %85 = vmatmul.mubr.bf16.gmra.mrb[0].mxu0 %v43
  %v86 = vpop.f32.mrb[0].mxu0
  %v87 = vadd.f32 0.0, %v86
  %v88 = vpop.f32.mrb[0].mxu0
  %v89 = vpop.f32.mrb[0].mxu0
  %v90 = vadd.f32 0.0, %v89
  %v91 = vpop.f32.mrb[0].mxu0
  %92 = vmatprep.mubr.bf16.mxu0 0
  %93 = vmatmul.mubr.bf16.gmra.mrb[0].mxu0 %v46
  %v94 = vpop.f32.mrb[0].mxu0
  %v95 = vadd.f32 0.0, %v94
  %v96 = vpop.f32.mrb[0].mxu0
  %v97 = vpop.f32.mrb[0].mxu0
  %v98 = vadd.f32 0.0, %v97
  %v99 = vpop.f32.mrb[0].mxu0
  %100 = vdwg.mxu0
  %v101 = vmax.f32 %v87, 0.0
  %v102 = vmax.f32 %v90, 0.0
  %v103 = vmax.f32 %v95, 0.0
  %v104 = vmax.f32 %v98, 0.0
  %v105 = vld [vmem:[%s2] sm:$0xf]
  %v106 = vld [vmem:[%s2 + $0x4] sm:$0xf]
  %v107 = vld [vmem:[%s2 + $0x8] sm:$0xf]
  %v108 = vld [vmem:[%s2 + $0xc] sm:$0xf]
  %v109 = vpack.c.bf16 %v102, %v101
  %v110 = vpack.c.bf16 %v104, %v103
  %v111 = vld [vmem:[%s3] sm:$0xff]
  %v112 = vld [vmem:[%s3 + $0x8] sm:$0xff]
  %v113 = vld [vmem:[%s3 + $0x10] sm:$0xff]
  %v114 = vld [vmem:[%s3 + $0x18] sm:$0xff]
  %116 = vset.pattern.permute.xlu0 0
  %117 = vperm.xlu0 %116, %v111
  %v118 = vpop.permute.xlu0 %117
  %121 = vset.pattern.permute.xlu0 0
  %122 = vperm.xlu0 %121, %v112
  %v123 = vpop.permute.xlu0 %122
  %126 = vset.pattern.permute.xlu0 0
  %127 = vperm.xlu0 %126, %v113
  %v128 = vpop.permute.xlu0 %127
  %131 = vset.pattern.permute.xlu0 0
  %132 = vperm.xlu0 %131, %v114
  %v133 = vpop.permute.xlu0 %132
  %v139 = vunpack.c.l.b16 %v105
  %v140 = vunpack.c.l.b16 %v106
  %v141 = vunpack.c.l.b16 %v107
  %v142 = vunpack.c.l.b16 %v108
  %v143 = vpack.c.b16 %v140, %v139
  %v144 = vpack.c.b16 %v142, %v141
  %vm145 = vcmask 261120
  %v147 = vsel %vm145, %v143, 0
  %v150 = vsel %vm145, %v144, 0
  %152 = vmatprep.subr.bf16.mxu0 0
  %153 = vmatpush1.bf16.msra.mxu0 %v109
  %154 = vmatprep.subr.bf16.mxu0 0
  %155 = vmatpush1.bf16.msra.mxu0 %v110
  %156 = vmatprep.subr.bf16.mxu0 0
  %157 = vmatpush1.bf16.msra.mxu0 0
  %158 = vmatprep.subr.bf16.mxu0 0
  %159 = vmatpush1.bf16.msra.mxu0 0
  %160 = vmatprep.subr.bf16.mxu0 0
  %161 = vmatpush1.bf16.msra.mxu0 0
  %162 = vmatprep.subr.bf16.mxu0 0
  %163 = vmatpush1.bf16.msra.mxu0 0
  %164 = vmatprep.subr.bf16.mxu0 0
  %165 = vmatpush1.bf16.msra.mxu0 0
  %166 = vmatprep.subr.bf16.mxu0 0
  %167 = vmatpush1.bf16.msra.mxu0 0
  %168 = vmatprep.subr.bf16.mxu0 0
  %169 = vmatpush1.bf16.msra.mxu0 0
  %170 = vmatprep.subr.bf16.mxu0 0
  %171 = vmatpush1.bf16.msra.mxu0 0
  %172 = vmatprep.subr.bf16.mxu0 0
  %173 = vmatpush1.bf16.msra.mxu0 0
  %174 = vmatprep.subr.bf16.mxu0 0
  %175 = vmatpush1.bf16.msra.mxu0 0
  %176 = vmatprep.subr.bf16.mxu0 0
  %177 = vmatpush1.bf16.msra.mxu0 0
  %178 = vmatprep.subr.bf16.mxu0 0
  %179 = vmatpush1.bf16.msra.mxu0 0
  %180 = vmatprep.subr.bf16.mxu0 0
  %181 = vmatpush1.bf16.msra.mxu0 0
  %182 = vmatprep.subr.bf16.mxu0 0
  %183 = vmatpush1.bf16.msra.mxu0 0
  %184 = vmatprep.mubr.bf16.mxu0 0
  %185 = vmatmul.mubr.bf16.gmra.mrb[0].mxu0 %v147
  %v186 = vpop.f32.mrb[0].mxu0
  %v187 = vadd.f32 %v118, %v186
  %v188 = vpop.f32.mrb[0].mxu0
  %v189 = vpop.f32.mrb[0].mxu0
  %v190 = vadd.f32 %v123, %v189
  %v191 = vpop.f32.mrb[0].mxu0
  %192 = vmatprep.mubr.bf16.mxu0 0
  %193 = vmatmul.mubr.bf16.gmra.mrb[0].mxu0 %v150
  %v194 = vpop.f32.mrb[0].mxu0
  %v195 = vadd.f32 %v128, %v194
  %v196 = vpop.f32.mrb[0].mxu0
  %v197 = vpop.f32.mrb[0].mxu0
  %v198 = vadd.f32 %v133, %v197
  %v199 = vpop.f32.mrb[0].mxu0
  %200 = vdwg.mxu0
  %v201 = vmax.f32 %v187, 0.0
  %v202 = vmax.f32 %v190, 0.0
  %v203 = vmax.f32 %v195, 0.0
  %v204 = vmax.f32 %v198, 0.0
  %v205 = vld [vmem:[%s4] sm:$0x1]
  %v206 = vpack.c.bf16 %v202, %v201
  %v207 = vpack.c.bf16 %v204, %v203
  %v208 = vld [vmem:[#allocation2] sm:$0x1]
  %210 = vset.pattern.permute.xlu0 0
  %211 = vperm.xlu0 %210, %v208
  %v212 = vpop.permute.xlu0 %211
  %v214 = vlaneseq
  %v215 = vshrl.u32 %v214, 7
  %v216 = vsub.s32 0, %v215
  %v217 = vrot.slane %v212, %v216
  %v219 = vsel %vm145, %v205, 0
  %221 = vmatprep.subr.bf16.mxu0 0
  %222 = vmatpush1.bf16.msra.mxu0 %v206
  %223 = vmatprep.subr.bf16.mxu0 0
  %224 = vmatpush1.bf16.msra.mxu0 %v207
  %225 = vmatprep.subr.bf16.mxu0 0
  %226 = vmatpush1.bf16.msra.mxu0 0
  %227 = vmatprep.subr.bf16.mxu0 0
  %228 = vmatpush1.bf16.msra.mxu0 0
  %229 = vmatprep.subr.bf16.mxu0 0
  %230 = vmatpush1.bf16.msra.mxu0 0
  %231 = vmatprep.subr.bf16.mxu0 0
  %232 = vmatpush1.bf16.msra.mxu0 0
  %233 = vmatprep.subr.bf16.mxu0 0
  %234 = vmatpush1.bf16.msra.mxu0 0
  %235 = vmatprep.subr.bf16.mxu0 0
  %236 = vmatpush1.bf16.msra.mxu0 0
  %237 = vmatprep.subr.bf16.mxu0 0
  %238 = vmatpush1.bf16.msra.mxu0 0
  %239 = vmatprep.subr.bf16.mxu0 0
  %240 = vmatpush1.bf16.msra.mxu0 0
  %241 = vmatprep.subr.bf16.mxu0 0
  %242 = vmatpush1.bf16.msra.mxu0 0
  %243 = vmatprep.subr.bf16.mxu0 0
  %244 = vmatpush1.bf16.msra.mxu0 0
  %245 = vmatprep.subr.bf16.mxu0 0
  %246 = vmatpush1.bf16.msra.mxu0 0
  %247 = vmatprep.subr.bf16.mxu0 0
  %248 = vmatpush1.bf16.msra.mxu0 0
  %249 = vmatprep.subr.bf16.mxu0 0
  %250 = vmatpush1.bf16.msra.mxu0 0
  %251 = vmatprep.subr.bf16.mxu0 0
  %252 = vmatpush1.bf16.msra.mxu0 0
  %253 = vmatprep.mubr.bf16.mxu0 0
  %254 = vmatmul.mubr.bf16.gmra.mrb[0].mxu0 %v219
  %v255 = vpop.f32.mrb[0].mxu0
  %v256 = vadd.f32 %v217, %v255
  %v257 = vpop.f32.mrb[0].mxu0
  %v258 = vpop.f32.mrb[0].mxu0
  %v259 = vpop.f32.mrb[0].mxu0
  %260 = vdwg.mxu0
  %261 = vst [vmem:[%s6] sm:$0x1] %v256
  // Predicated region
  $region26: #{_forward_impl.1} parent=0 // pred_check
    _
  $region27: #{_forward_impl.1} parent=0 // pred_check_branch
    %263 = sbr.rel (0) target = $region29
  $region28: #{_forward_impl.1} parent=0 // pred_region
    _
  $region29: #{_forward_impl.1} parent=0 // pred_fallthru
    _
  // Predicated region
  $region30: #{_forward_impl.1} parent=0 // pred_check
    _
  $region31: #{_forward_impl.1} parent=0 // pred_check_branch
    %265 = sbr.rel (0) target = $region33
  $region32: #{_forward_impl.1} parent=0 // pred_region
    _
  $region33: #{_forward_impl.1} parent=0 // pred_fallthru
    _

</llo_original>
